<compile_context>
chip_gen: v7x
topology: tpu7x:2x2x1
jax: 0.10.0
libtpu: 0.0.40
codegen_flags: <defaults>
</compile_context>

<pallas_src>
import jax
import jax.numpy as jnp
from jax.experimental import pallas as pl
from jax.experimental.pallas import tpu as pltpu


def resblock1x1_kernel(x_ref, w1_ref, w2_ref, b1_ref, b2_ref, o_ref):
    # x_ref: (C, t_hw) bf16 tile of one image (batch dim squeezed by BlockSpec).
    # w1_ref/w2_ref: (C, C) bf16 weights with BN scale pre-folded into the rows.
    # b1_ref/b2_ref: (C, 1) f32 BN shifts (broadcast along the lane/pixel axis).
    x = x_ref[...]

    # conv1 (1x1) as channel matmul on the MXU, f32 accumulation.
    h = jnp.dot(w1_ref[...], x, preferred_element_type=jnp.float32)
    # bn1 shift (scale already folded into w1) + relu, in f32.
    h = jnp.maximum(h + b1_ref[...], 0.0)

    # conv2 (1x1): bf16 operand, f32 accumulation.
    h2 = jnp.dot(w2_ref[...], h.astype(jnp.bfloat16),
                 preferred_element_type=jnp.float32)
    # bn2 shift + residual add + relu, all in f32; single cast at the store.
    out = jnp.maximum(x.astype(jnp.float32) + h2 + b2_ref[...], 0.0)
    o_ref[...] = out.astype(o_ref.dtype)


def resblock1x1_pallas(x_nchw, w1, w2, bn1, bn2, *, eps=1e-5, tile_hw=512,
                       vmem_budget_bytes=48 * 1024 * 1024):
    """x_nchw: (N, C, H, W). w1, w2: (C_out, C_in) 1x1-conv weights (C_out == C_in == C).
    bn1/bn2: dicts with gamma, beta, running_mean, running_var (each shape (C,))."""
    N, C, H, W = x_nchw.shape
    out_dtype = x_nchw.dtype
    HW = H * W

    # Fold BN (eval mode) into the conv weights (exact; done in f32 BEFORE the bf16 cast).
    #   BN(Wx) = diag(scale) @ W @ x + shift
    def fold(w, bn):
        scale = (bn["gamma"].astype(jnp.float32)
                 / jnp.sqrt(bn["running_var"].astype(jnp.float32) + eps))
        shift = bn["beta"].astype(jnp.float32) - bn["running_mean"].astype(jnp.float32) * scale
        w_folded = (scale[:, None] * w.astype(jnp.float32)).astype(jnp.bfloat16)  # (Cout, Cin)
        return w_folded, shift.reshape(C, 1)

    w1f, b1 = fold(w1, bn1)
    w2f, b2 = fold(w2, bn2)

    # NCHW -> (N, C, H*W): pure reshape, no transpose / extra HBM pass.
    x3 = x_nchw.reshape(N, C, HW).astype(jnp.bfloat16)

    def round_up(a, b):
        return ((a + b - 1) // b) * b

    # Pick the largest lane tile (multiple of 128) that fits the VMEM budget,
    # assuming default double-buffering for every input/output block.
    t_hw = min(round_up(tile_hw, 128), round_up(HW, 128))

    def vmem_est(t):
        x_tile = t * C * 2                                   # bf16 input tile
        o_tile = t * C * jnp.dtype(out_dtype).itemsize       # output tile
        wts = 2 * C * C * 2                                  # both bf16 weight mats
        shifts = 2 * C * 4                                   # f32 shift vectors
        return 2 * (x_tile + o_tile + wts + shifts)          # x2 for double buffering

    while vmem_est(t_hw) > vmem_budget_bytes and t_hw > 128:
        t_hw -= 128

    # Pad the pixel axis to a tile multiple (padded columns are independent under a
    # 1x1 conv, so they never contaminate real pixels; sliced off below).
    HW_p = round_up(HW, t_hw)
    if HW_p != HW:
        x3 = jnp.pad(x3, ((0, 0), (0, 0), (0, HW_p - HW)))

    grid = (N, HW_p // t_hw)

    # Explicit VMEM limit with headroom; capped so it stays valid on v7x (64 MiB/TC).
    vmem_limit = int(min(max(4 * vmem_est(t_hw), 16 * 1024 * 1024), 64 * 1024 * 1024))

    out3 = pl.pallas_call(
        resblock1x1_kernel,
        out_shape=jax.ShapeDtypeStruct((N, C, HW_p), out_dtype),
        grid_spec=pltpu.PrefetchScalarGridSpec(
            num_scalar_prefetch=0,
            grid=grid,
            in_specs=[
                # x tile: batch dim squeezed, full C on sublanes, lane-dense pixel tile.
                pl.BlockSpec((None, C, t_hw), lambda n, j: (n, 0, j)),
                # Weights are grid-invariant (constant index_map -> fetched once and reused).
                pl.BlockSpec((C, C), lambda n, j: (0, 0)),   # W1 with BN1 scale folded in
                pl.BlockSpec((C, C), lambda n, j: (0, 0)),   # W2 with BN2 scale folded in
                pl.BlockSpec((C, 1), lambda n, j: (0, 0)),   # bn1 shift
                pl.BlockSpec((C, 1), lambda n, j: (0, 0)),   # bn2 shift
            ],
            out_specs=pl.BlockSpec((None, C, t_hw), lambda n, j: (n, 0, j)),
        ),
        compiler_params=pltpu.CompilerParams(
            dimension_semantics=("parallel", "parallel"),
            vmem_limit_bytes=vmem_limit,
        ),
    )(x3, w1f, w2f, b1, b2)

    # Drop pixel padding, restore (N, C, H, W) with a free reshape (no transpose).
    return out3[:, :, :HW].reshape(N, C, H, W)


def resblock1x1_reference(x_nchw, w1, w2, bn1, bn2, eps=1e-5):
    # Pure-JAX f32 reference (eval-mode BN), NCHW semantics like PyTorch.
    def bn_apply(y, bn):
        g = bn["gamma"].reshape(1, -1, 1, 1)
        b = bn["beta"].reshape(1, -1, 1, 1)
        m = bn["running_mean"].reshape(1, -1, 1, 1)
        v = bn["running_var"].reshape(1, -1, 1, 1)
        return (y - m) / jnp.sqrt(v + eps) * g + b

    def conv1x1(y, w):  # y: NCHW, w: (Cout, Cin)
        return jnp.einsum("nchw,oc->nohw", y, w)

    out = jax.nn.relu(bn_apply(conv1x1(x_nchw, w1), bn1))
    out = jax.nn.relu(x_nchw + bn_apply(conv1x1(out, w2), bn2))
    return out


if __name__ == "__main__":
    # Residual add requires in_channel == out_channel and stride == 1.
    N, C, H, W = 2, 4, 16, 16

    key = jax.random.PRNGKey(0)
    kx, kw1, kw2, kg1, kb1, kg2, kb2, km1, kv1, km2, kv2 = jax.random.split(key, 11)

    x = jax.random.normal(kx, (N, C, H, W), dtype=jnp.float32)
    w1 = jax.random.normal(kw1, (C, C), dtype=jnp.float32) * 0.2   # conv1 weight (Cout, Cin)
    w2 = jax.random.normal(kw2, (C, C), dtype=jnp.float32) * 0.2   # conv2 weight

    bn1 = dict(
        gamma=jax.random.uniform(kg1, (C,), minval=0.5, maxval=1.5),
        beta=jax.random.normal(kb1, (C,)) * 0.1,
        running_mean=jax.random.normal(km1, (C,)) * 0.1,
        running_var=jax.random.uniform(kv1, (C,), minval=0.5, maxval=1.5),
    )
    bn2 = dict(
        gamma=jax.random.uniform(kg2, (C,), minval=0.5, maxval=1.5),
        beta=jax.random.normal(kb2, (C,)) * 0.1,
        running_mean=jax.random.normal(km2, (C,)) * 0.1,
        running_var=jax.random.uniform(kv2, (C,), minval=0.5, maxval=1.5),
    )

    out = resblock1x1_pallas(x, w1, w2, bn1, bn2)
    out = jax.block_until_ready(out)

    ref = resblock1x1_reference(x, w1, w2, bn1, bn2)
    assert out.shape == (N, C, H, W)
    # bf16 MXU operands (x / weights / intermediate) with f32 accumulation: loosen the
    # tolerance accordingly vs. the pure-f32 reference.
    assert jnp.allclose(out, ref, atol=5e-2, rtol=5e-2), "mismatch vs reference"

    print("KERNEL_OK")
</pallas_src>

<mosaic_0001>
module attributes {stable_mosaic.version = 11 : i64} {
  func.func @resblock1x1_kernel(%arg0: i32, %arg1: i32, %arg2: memref<1x4x256xbf16, #tpu.memory_space<vmem>>, %arg3: memref<4x4xbf16, #tpu.memory_space<vmem>>, %arg4: memref<4x4xbf16, #tpu.memory_space<vmem>>, %arg5: memref<4x1xf32, #tpu.memory_space<vmem>>, %arg6: memref<4x1xf32, #tpu.memory_space<vmem>>, %arg7: memref<1x4x256xf32, #tpu.memory_space<vmem>>) attributes {dimension_semantics = [#tpu.dimension_semantics<parallel>, #tpu.dimension_semantics<parallel>], iteration_bounds = array<i64: 2, 1>, scalar_prefetch = 0 : i64, scratch_operands = 0 : i64, tpu.core_type = #tpu.core_type<tc>, window_params = [{transform_indices = @transform_0, window_bounds = array<i64: 1, 4, 256>}, {pipeline_mode = #tpu.pipeline_mode<synchronous>, transform_indices = @transform_1, window_bounds = array<i64: 4, 4>}, {pipeline_mode = #tpu.pipeline_mode<synchronous>, transform_indices = @transform_2, window_bounds = array<i64: 4, 4>}, {pipeline_mode = #tpu.pipeline_mode<synchronous>, transform_indices = @transform_3, window_bounds = array<i64: 4, 1>}, {pipeline_mode = #tpu.pipeline_mode<synchronous>, transform_indices = @transform_4, window_bounds = array<i64: 4, 1>}, {transform_indices = @transform_5, window_bounds = array<i64: 1, 4, 256>}]} {
    %c0 = arith.constant 0 : index
    %c0_0 = arith.constant 0 : index
    %c0_1 = arith.constant 0 : index
    %0 = vector.load %arg2[%c0, %c0_0, %c0_1] : memref<1x4x256xbf16, #tpu.memory_space<vmem>>, vector<1x4x256xbf16>
    %1 = vector.shape_cast %0 : vector<1x4x256xbf16> to vector<4x256xbf16>
    %c0_2 = arith.constant 0 : index
    %c0_3 = arith.constant 0 : index
    %2 = vector.load %arg3[%c0_2, %c0_3] : memref<4x4xbf16, #tpu.memory_space<vmem>>, vector<4x4xbf16>
    %cst = arith.constant dense<0.000000e+00> : vector<4x256xf32>
    %3 = tpu.matmul %2, %1, %cst {dimension_numbers = #tpu.dot_dimension_numbers<[1], [0], [0], [1], [0, 0, 1, 1], [], []>} : vector<4x4xbf16>, vector<4x256xbf16>, vector<4x256xf32> -> vector<4x256xf32>
    %c0_4 = arith.constant 0 : index
    %c0_5 = arith.constant 0 : index
    %4 = vector.load %arg5[%c0_4, %c0_5] : memref<4x1xf32, #tpu.memory_space<vmem>>, vector<4x1xf32>
    %5 = vector.broadcast %4 : vector<4x1xf32> to vector<4x256xf32>
    %6 = arith.addf %3, %5 : vector<4x256xf32>
    %cst_6 = arith.constant 0.000000e+00 : f32
    %7 = vector.broadcast %cst_6 : f32 to vector<4x256xf32>
    %8 = arith.maximumf %6, %7 : vector<4x256xf32>
    %c0_7 = arith.constant 0 : index
    %c0_8 = arith.constant 0 : index
    %9 = vector.load %arg4[%c0_7, %c0_8] : memref<4x4xbf16, #tpu.memory_space<vmem>>, vector<4x4xbf16>
    %10 = arith.truncf %8 : vector<4x256xf32> to vector<4x256xbf16>
    %cst_9 = arith.constant dense<0.000000e+00> : vector<4x256xf32>
    %11 = tpu.matmul %9, %10, %cst_9 {dimension_numbers = #tpu.dot_dimension_numbers<[1], [0], [0], [1], [0, 0, 1, 1], [], []>} : vector<4x4xbf16>, vector<4x256xbf16>, vector<4x256xf32> -> vector<4x256xf32>
    %12 = arith.extf %1 : vector<4x256xbf16> to vector<4x256xf32>
    %13 = arith.addf %12, %11 : vector<4x256xf32>
    %c0_10 = arith.constant 0 : index
    %c0_11 = arith.constant 0 : index
    %14 = vector.load %arg6[%c0_10, %c0_11] : memref<4x1xf32, #tpu.memory_space<vmem>>, vector<4x1xf32>
    %15 = vector.broadcast %14 : vector<4x1xf32> to vector<4x256xf32>
    %16 = arith.addf %13, %15 : vector<4x256xf32>
    %cst_12 = arith.constant 0.000000e+00 : f32
    %17 = vector.broadcast %cst_12 : f32 to vector<4x256xf32>
    %18 = arith.maximumf %16, %17 : vector<4x256xf32>
    %c0_13 = arith.constant 0 : index
    %c0_14 = arith.constant 0 : index
    %c0_15 = arith.constant 0 : index
    %19 = vector.load %arg7[%c0_13, %c0_14, %c0_15] : memref<1x4x256xf32, #tpu.memory_space<vmem>>, vector<1x4x256xf32>
    %20 = vector.shape_cast %19 : vector<1x4x256xf32> to vector<4x256xf32>
    %21 = vector.shape_cast %18 : vector<4x256xf32> to vector<1x4x256xf32>
    tpu.vector_store %arg7[%c0_13, %c0_14, %c0_15], %21 {strides = array<i32>} : memref<1x4x256xf32, #tpu.memory_space<vmem>>, vector<1x4x256xf32>,
    return
  }
  func.func @transform_0(%arg0: i32, %arg1: i32) -> (i32, i32, i32) {
    %c0_i32 = arith.constant 0 : i32
    %c0_i32_0 = arith.constant 0 : i32
    return %arg0, %c0_i32, %arg1 : i32, i32, i32
  }
  func.func @transform_1(%arg0: i32, %arg1: i32) -> (i32, i32) {
    %c0_i32 = arith.constant 0 : i32
    %c0_i32_0 = arith.constant 0 : i32
    %c0_i32_1 = arith.constant 0 : i32
    return %c0_i32, %c0_i32_0 : i32, i32
  }
  func.func @transform_2(%arg0: i32, %arg1: i32) -> (i32, i32) {
    %c0_i32 = arith.constant 0 : i32
    %c0_i32_0 = arith.constant 0 : i32
    %c0_i32_1 = arith.constant 0 : i32
    return %c0_i32, %c0_i32_0 : i32, i32
  }
  func.func @transform_3(%arg0: i32, %arg1: i32) -> (i32, i32) {
    %c0_i32 = arith.constant 0 : i32
    %c0_i32_0 = arith.constant 0 : i32
    %c0_i32_1 = arith.constant 0 : i32
    return %c0_i32, %c0_i32_0 : i32, i32
  }
  func.func @transform_4(%arg0: i32, %arg1: i32) -> (i32, i32) {
    %c0_i32 = arith.constant 0 : i32
    %c0_i32_0 = arith.constant 0 : i32
    %c0_i32_1 = arith.constant 0 : i32
    return %c0_i32, %c0_i32_0 : i32, i32
  }
  func.func @transform_5(%arg0: i32, %arg1: i32) -> (i32, i32, i32) {
    %c0_i32 = arith.constant 0 : i32
    %c0_i32_0 = arith.constant 0 : i32
    return %arg0, %c0_i32, %arg1 : i32, i32, i32
  }
}

</mosaic_0001>

<llo_original>
// kernel: tpu_custom_call.1
$region0: #{tpu_custom_call.1}
  #allocation0 [shape = 'u32[]', space=smem, size = 0x4, offset = 0x4, fixed_abs, tag = 'smem constant byte address 0x4 - core index']
  #allocation1 [shape = 'u32[144,128]{1,0:T(1,128)}', space=vmem, size = 0x12000, scoped, tag = 'internal scratch']
  %s0 = inlined_call_operand.vmem [shape: bf16[2,4,256], index: 0, kind: input, shape index: {}]
  %s1 = inlined_call_operand.vmem [shape: bf16[4,4], index: 1, kind: input, shape index: {}]
  %s2 = inlined_call_operand.vmem [shape: bf16[4,4], index: 2, kind: input, shape index: {}]
  %s3 = inlined_call_operand.vmem [shape: f32[4,1], index: 3, kind: input, shape index: {}]
  %s4 = inlined_call_operand.vmem [shape: f32[4,1], index: 4, kind: input, shape index: {}]
  %s5 = inlined_call_operand.hbm [shape: f32[2,4,256], index: 5, kind: output, shape index: {}]
  %s6 = sld [smem:[#allocation0]]
  $region53: #{tpu_custom_call.1} parent=0
    _
  %s8 = ssub.s32 1, %s6
  %s9 = scalar_select 0, %s8, %s6
  $region1: #{tpu_custom_call.1} parent=0
    #allocation2 [shape = 'u8[8192]{0}', space=vmem, size = 0x2000, scoped, tag = 'output window, operand 0']
    #allocation3 [shape = 's32[2]{0}', space=sflag, size = 0x8, scoped, tag = 'scoped memory for tpu_custom_call.1']
    %10 = vsyncpa [#allocation3], 0
    %s11 = scalar_lea.sflag [#allocation3], 1
    %12 = vsyncpa %s11, 0
    loop: start=0, step=1, limit=4
    $region2: #{tpu_custom_call.1} parent=1 // loop_pre_header
      _
    $region3: #{tpu_custom_call.1} parent=1 // loop_header
      %s14 = sphi 0, %s18
      %p15 = scmp.ge.s32.totalorder %s14, 4
      %s21 = sphi 0, %s33
      %s22 = sphi 0, %s29
      %s23 = sphi 0, %s21
      %s24 = sphi 0, %s22
      %s25 = sphi 0, %s23
      %s26 = sphi 0, %s24
      %s38 = sphi 0, %s40
      %s41 = sphi 0, %s38
      %s42 = sphi 0, %s41
      %s58 = sphi 0, %s42
      %s62 = sphi 0, %s62
      %s64 = sphi 0, %s62
      %s65 = sphi 0, %s64
      %s79 = sphi 0, %s65
      %s83 = sphi 0, %s83
      %s85 = sphi 0, %s83
      %s86 = sphi 0, %s85
      %s100 = sphi 0, %s86
      %s104 = sphi 0, %s104
      %s106 = sphi 0, %s104
      %s107 = sphi 0, %s106
      %s121 = sphi 0, %s107
      %s125 = sphi 0, %s125
      %s127 = sphi 0, %s125
      %s128 = sphi 0, %s127
      %s142 = sphi 0, %s128
      %s150 = sphi 0, %s152
      %s153 = sphi 0, %s150
      %s154 = sphi 0, %s153
      %s170 = sphi 0, %s154
    $region4: #{tpu_custom_call.1} parent=1 // loop_header_branch
      %17 = sbr.rel (%p15) target = $region8
    $region5: #{tpu_custom_call.1} parent=1 // loop_body
      %s19 = ssub.s32 %s14, 1
      %s20 = ssub.s32 %s14, 2
      %s27 = sadd.s32 1, %s22
      %p28 = scmp.ge.s32.totalorder %s27, 1
      %s29 = scalar_select %p28, 0, %s27
      %s30 = sadd.s32 1, %s21
      %s31 = scalar_select %p28, %s30, %s21
      %p32 = scmp.ge.s32.totalorder %s31, 2
      %s33 = scalar_select %p32, 0, %s31
      %s34 = ssub.s32 %s21, %s33
      %s35 = ssub.s32 %s22, %s29
      %s36 = sor.u32 %s34, %s35
      %p37 = scmp.eq.s32.totalorder %s36, 0
      %s39 = sadd.s32 %s38, 1
      %s40 = scalar_select %p37, %s38, %s39
      %p43 = pneg %p37
      %p44 = scmp.eq.s32.totalorder %s14, 1
      %p45 = por %p43, %p44
      %p46 = scmp.ne.s32.totalorder %s38, %s41
      %p47 = scmp.eq.s32.totalorder %s14, 0
      %p48 = por %p46, %p47
      %p49 = scmp.ne.s32.totalorder %s38, %s41
      %p50 = scmp.eq.s32.totalorder %s19, 1
      %p51 = por %p49, %p50
      %p52 = scmp.ne.s32.totalorder %s41, %s42
      %p53 = scmp.eq.s32.totalorder %s19, 0
      %p54 = por %p52, %p53
      %p55 = scmp.ne.s32.totalorder %s41, %s42
      %p56 = scmp.eq.s32.totalorder %s20, 1
      %p57 = por %p55, %p56
      %p59 = scmp.ne.s32.totalorder %s42, %s58
      %p60 = scmp.eq.s32.totalorder %s20, 0
      %p61 = por %p59, %p60
      %s63 = sadd.s32 %s62, 1
      %p66 = scmp.eq.s32.totalorder %s14, 1
      %p67 = scmp.ne.s32.totalorder %s62, %s64
      %p68 = scmp.eq.s32.totalorder %s14, 0
      %p69 = por %p67, %p68
      %p70 = scmp.ne.s32.totalorder %s62, %s64
      %p71 = scmp.eq.s32.totalorder %s19, 1
      %p72 = por %p70, %p71
      %p73 = scmp.ne.s32.totalorder %s64, %s65
      %p74 = scmp.eq.s32.totalorder %s19, 0
      %p75 = por %p73, %p74
      %p76 = scmp.ne.s32.totalorder %s64, %s65
      %p77 = scmp.eq.s32.totalorder %s20, 1
      %p78 = por %p76, %p77
      %p80 = scmp.ne.s32.totalorder %s65, %s79
      %p81 = scmp.eq.s32.totalorder %s20, 0
      %p82 = por %p80, %p81
      %s84 = sadd.s32 %s83, 1
      %p87 = scmp.eq.s32.totalorder %s14, 1
      %p88 = scmp.ne.s32.totalorder %s83, %s85
      %p89 = scmp.eq.s32.totalorder %s14, 0
      %p90 = por %p88, %p89
      %p91 = scmp.ne.s32.totalorder %s83, %s85
      %p92 = scmp.eq.s32.totalorder %s19, 1
      %p93 = por %p91, %p92
      %p94 = scmp.ne.s32.totalorder %s85, %s86
      %p95 = scmp.eq.s32.totalorder %s19, 0
      %p96 = por %p94, %p95
      %p97 = scmp.ne.s32.totalorder %s85, %s86
      %p98 = scmp.eq.s32.totalorder %s20, 1
      %p99 = por %p97, %p98
      %p101 = scmp.ne.s32.totalorder %s86, %s100
      %p102 = scmp.eq.s32.totalorder %s20, 0
      %p103 = por %p101, %p102
      %s105 = sadd.s32 %s104, 1
      %p108 = scmp.eq.s32.totalorder %s14, 1
      %p109 = scmp.ne.s32.totalorder %s104, %s106
      %p110 = scmp.eq.s32.totalorder %s14, 0
      %p111 = por %p109, %p110
      %p112 = scmp.ne.s32.totalorder %s104, %s106
      %p113 = scmp.eq.s32.totalorder %s19, 1
      %p114 = por %p112, %p113
      %p115 = scmp.ne.s32.totalorder %s106, %s107
      %p116 = scmp.eq.s32.totalorder %s19, 0
      %p117 = por %p115, %p116
      %p118 = scmp.ne.s32.totalorder %s106, %s107
      %p119 = scmp.eq.s32.totalorder %s20, 1
      %p120 = por %p118, %p119
      %p122 = scmp.ne.s32.totalorder %s107, %s121
      %p123 = scmp.eq.s32.totalorder %s20, 0
      %p124 = por %p122, %p123
      %s126 = sadd.s32 %s125, 1
      %p129 = scmp.eq.s32.totalorder %s14, 1
      %p130 = scmp.ne.s32.totalorder %s125, %s127
      %p131 = scmp.eq.s32.totalorder %s14, 0
      %p132 = por %p130, %p131
      %p133 = scmp.ne.s32.totalorder %s125, %s127
      %p134 = scmp.eq.s32.totalorder %s19, 1
      %p135 = por %p133, %p134
      %p136 = scmp.ne.s32.totalorder %s127, %s128
      %p137 = scmp.eq.s32.totalorder %s19, 0
      %p138 = por %p136, %p137
      %p139 = scmp.ne.s32.totalorder %s127, %s128
      %p140 = scmp.eq.s32.totalorder %s20, 1
      %p141 = por %p139, %p140
      %p143 = scmp.ne.s32.totalorder %s128, %s142
      %p144 = scmp.eq.s32.totalorder %s20, 0
      %p145 = por %p143, %p144
      %s146 = ssub.s32 %s21, %s33
      %s147 = ssub.s32 %s22, %s29
      %s148 = sor.u32 %s146, %s147
      %p149 = scmp.eq.s32.totalorder %s148, 0
      %s151 = sadd.s32 %s150, 1
      %s152 = scalar_select %p149, %s150, %s151
      %p155 = pneg %p149
      %p156 = scmp.eq.s32.totalorder %s14, 1
      %p157 = por %p155, %p156
      %p158 = scmp.ne.s32.totalorder %s150, %s153
      %p159 = scmp.eq.s32.totalorder %s14, 0
      %p160 = por %p158, %p159
      %p161 = scmp.ne.s32.totalorder %s150, %s153
      %p162 = scmp.eq.s32.totalorder %s19, 1
      %p163 = por %p161, %p162
      %p164 = scmp.ne.s32.totalorder %s153, %s154
      %p165 = scmp.eq.s32.totalorder %s19, 0
      %p166 = por %p164, %p165
      %p167 = scmp.ne.s32.totalorder %s153, %s154
      %p168 = scmp.eq.s32.totalorder %s20, 1
      %p169 = por %p167, %p168
      %p171 = scmp.ne.s32.totalorder %s154, %s170
      %p172 = scmp.eq.s32.totalorder %s20, 0
      %p173 = por %p171, %p172
      %p174 = scmp.le.s32.totalorder 1, %s14
      %p175 = scmp.lt.s32.totalorder %s14, 3
      %p176 = pnand %p174, %p175
      %p177 = pneg %p176
      // Predicated region
      $region9: #{tpu_custom_call.1} parent=5 // pred_check
        _
      $region10: #{tpu_custom_call.1} parent=5 // pred_check_branch
        %179 = sbr.rel (%p176) target = $region12
      $region11: #{tpu_custom_call.1} parent=5 // pred_region
        %s180 = ssub.s32 %s14, 1
        // Predicated region
        $region13: #{tpu_custom_call.1} parent=11 // pred_check
          %p181 = pneg %p75
        $region14: #{tpu_custom_call.1} parent=11 // pred_check_branch
          %183 = sbr.rel (%p181) target = $region16
        $region15: #{tpu_custom_call.1} parent=11 // pred_region
          _
        $region16: #{tpu_custom_call.1} parent=11 // pred_fallthru
          _
        // Predicated region
        $region17: #{tpu_custom_call.1} parent=11 // pred_check
          %p184 = pneg %p96
        $region18: #{tpu_custom_call.1} parent=11 // pred_check_branch
          %186 = sbr.rel (%p184) target = $region20
        $region19: #{tpu_custom_call.1} parent=11 // pred_region
          _
        $region20: #{tpu_custom_call.1} parent=11 // pred_fallthru
          _
        // Predicated region
        $region21: #{tpu_custom_call.1} parent=11 // pred_check
          %p187 = pneg %p117
        $region22: #{tpu_custom_call.1} parent=11 // pred_check_branch
          %189 = sbr.rel (%p187) target = $region24
        $region23: #{tpu_custom_call.1} parent=11 // pred_region
          _
        $region24: #{tpu_custom_call.1} parent=11 // pred_fallthru
          _
        // Predicated region
        $region25: #{tpu_custom_call.1} parent=11 // pred_check
          %p190 = pneg %p138
        $region26: #{tpu_custom_call.1} parent=11 // pred_check_branch
          %192 = sbr.rel (%p190) target = $region28
        $region27: #{tpu_custom_call.1} parent=11 // pred_region
          _
        $region28: #{tpu_custom_call.1} parent=11 // pred_fallthru
          _
      $region12: #{tpu_custom_call.1} parent=5 // pred_fallthru
        _
      %p193 = scmp.lt.s32.totalorder %s14, 2
      // Predicated region
      $region29: #{tpu_custom_call.1} parent=5 // pred_check
        %p194 = pneg %p193
      $region30: #{tpu_custom_call.1} parent=5 // pred_check_branch
        %196 = sbr.rel (%p194) target = $region32
      $region31: #{tpu_custom_call.1} parent=5 // pred_region
        // Predicated region
        $region33: #{tpu_custom_call.1} parent=31 // pred_check
          %p197 = pneg %p48
        $region34: #{tpu_custom_call.1} parent=31 // pred_check_branch
          %199 = sbr.rel (%p197) target = $region36
        $region35: #{tpu_custom_call.1} parent=31 // pred_region
          %s200 = smul.u32 2, %s22
          %p201 = scmp.lt.s32.totalorder %s21, 1
          %s202 = scalar_select %p201, %s21, 1
          %p203 = scmp.lt.s32.totalorder %s200, 1
          %s204 = scalar_select %p203, %s200, 1
          %s205 = smul.addr %s202, 2
          %s206 = sadd.s32 %s204, %s205
          %s207 = smul.addr %s206, 2
          %s208 = scalar_lea.vmem %s0, %s207
          %s209 = smul.u32 2, %s22
        $region36: #{tpu_custom_call.1} parent=31 // pred_fallthru
          _
      $region32: #{tpu_custom_call.1} parent=5 // pred_fallthru
        _
      %p210 = scmp.le.s32.totalorder 1, %s14
      %p211 = scmp.lt.s32.totalorder %s14, 3
      %p212 = pnand %p210, %p211
      %p213 = pneg %p212
      // Predicated region
      $region37: #{tpu_custom_call.1} parent=5 // pred_check
        _
      $region38: #{tpu_custom_call.1} parent=5 // pred_check_branch
        %215 = sbr.rel (%p212) target = $region40
      $region39: #{tpu_custom_call.1} parent=5 // pred_region
        %s216 = ssub.s32 %s14, 1
        %s217 = smul.u32 2, %s24
        %p218 = scmp.lt.s32.totalorder %s23, 1
        %s219 = scalar_select %p218, %s23, 1
        %p220 = scmp.lt.s32.totalorder %s217, 1
        %s221 = scalar_select %p220, %s217, 1
        %s222 = smul.addr %s219, 2
        %s223 = sadd.s32 %s221, %s222
        %s224 = smul.addr %s223, 2
        %s225 = scalar_lea.vmem %s0, %s224
        %p226 = pneg %p54
        %p227 = pneg %p51
        %p228 = pneg %p75
        %p229 = pneg %p72
        %p230 = pneg %p96
        %p231 = pneg %p93
        %p232 = pneg %p117
        %p233 = pneg %p114
        %p234 = pneg %p138
        %p235 = pneg %p135
        %p236 = pneg %p166
        %p237 = pneg %p163
        %s238 = sand.u32 %s153, 1
        %s239 = scalar_lea.sflag [#allocation3], %s238
        %s240 = sand.u32 %s153, 1
        %s241 = smul.addr %s240, 8
        %s242 = scalar_lea.vmem [#allocation2], %s241
        %s243 = smul.u32 2, %s24
        %p244 = scmp.lt.s32.totalorder %s23, 1
        %s245 = scalar_select %p244, %s23, 1
        %p246 = scmp.lt.s32.totalorder %s243, 1
        %s247 = scalar_select %p246, %s243, 1
        %s248 = smul.addr %s245, 2
        %s249 = sadd.s32 %s247, %s248
        %s250 = smul.addr %s249, 2
        %s251 = scalar_lea.vmem %s0, %s250
        %s252 = smul.u32 2, %s24
        %s253 = smul.u32 2, %s24
        %v255 = vld [vmem:[%s251] sm:$0xf]
        %v256 = vld [vmem:[%s1] sm:$0x3]
        %v257 = vld [vmem:[%s3] sm:$0xf]
        %259 = vset.pattern.permute.xlu0 0
        %260 = vperm.xlu0 %259, %v257
        %v261 = vpop.permute.xlu0 %260
        %v265 = vunpack.c.l.s4 1983009808
        %v266 = vunpack.c.0.s8 %v265
        %v267 = vlaneseq
        %v268 = vshrl.u32 %v267, 7
        %v269 = vsub.s32 %v266, %v268
        %v270 = vrot.slane %v255, %v269
        %v271 = vcombine.high %v270, %v270
        %vm272 = vcmask 31744
        %v274 = vsel %vm272, %v256, 0
        %vm276 = vcmask 1041408
        %v278 = vsel %vm276, %v270, 0
        %v281 = vsel %vm276, %v271, 0
        %283 = vmatprep.subr.bf16.mxu0 %v281
        %284 = vmatpush1.bf16.msra.mxu0 %v278
        %285 = vmatprep.subr.bf16.mxu0 0
        %286 = vmatpush1.bf16.msra.mxu0 0
        %287 = vmatprep.subr.bf16.mxu0 0
        %288 = vmatpush1.bf16.msra.mxu0 0
        %289 = vmatprep.subr.bf16.mxu0 0
        %290 = vmatpush1.bf16.msra.mxu0 0
        %291 = vmatprep.subr.bf16.mxu0 0
        %292 = vmatpush1.bf16.msra.mxu0 0
        %293 = vmatprep.subr.bf16.mxu0 0
        %294 = vmatpush1.bf16.msra.mxu0 0
        %295 = vmatprep.subr.bf16.mxu0 0
        %296 = vmatpush1.bf16.msra.mxu0 0
        %297 = vmatprep.subr.bf16.mxu0 0
        %298 = vmatpush1.bf16.msra.mxu0 0
        %299 = vmatprep.subr.bf16.mxu0 0
        %300 = vmatpush1.bf16.msra.mxu0 0
        %301 = vmatprep.subr.bf16.mxu0 0
        %302 = vmatpush1.bf16.msra.mxu0 0
        %303 = vmatprep.subr.bf16.mxu0 0
        %304 = vmatpush1.bf16.msra.mxu0 0
        %305 = vmatprep.subr.bf16.mxu0 0
        %306 = vmatpush1.bf16.msra.mxu0 0
        %307 = vmatprep.subr.bf16.mxu0 0
        %308 = vmatpush1.bf16.msra.mxu0 0
        %309 = vmatprep.subr.bf16.mxu0 0
        %310 = vmatpush1.bf16.msra.mxu0 0
        %311 = vmatprep.subr.bf16.mxu0 0
        %312 = vmatpush1.bf16.msra.mxu0 0
        %313 = vmatprep.subr.bf16.mxu0 0
        %314 = vmatpush1.bf16.msra.mxu0 0
        %315 = vmatprep.mubr.bf16.mxu0 0
        %316 = vmatmul.mubr.bf16.gmra.mrb[0].mxu0 %v274
        %v317 = vpop.f32.mrb[0].mxu0
        %v318 = vadd.f32 %v261, %v317
        %v319 = vpop.f32.mrb[0].mxu0
        %v320 = vadd.f32 %v261, %v319
        %v321 = vpop.f32.mrb[0].mxu0
        %v322 = vpop.f32.mrb[0].mxu0
        %323 = vdwg.mxu0
        %v324 = vmax.f32 %v318, 0.0
        %v325 = vmax.f32 %v320, 0.0
        %v326 = vld [vmem:[%s2] sm:$0x3]
        %v327 = vpack.c.bf16 %v324, %v324
        %v328 = vpack.c.bf16 %v325, %v325
        %v330 = vsel %vm272, %v326, 0
        %v333 = vsel %vm276, %v327, 0
        %v336 = vsel %vm276, %v328, 0
        %338 = vmatprep.subr.bf16.mxu0 %v336
        %339 = vmatpush1.bf16.msra.mxu0 %v333
        %340 = vmatprep.subr.bf16.mxu0 0
        %341 = vmatpush1.bf16.msra.mxu0 0
        %342 = vmatprep.subr.bf16.mxu0 0
        %343 = vmatpush1.bf16.msra.mxu0 0
        %344 = vmatprep.subr.bf16.mxu0 0
        %345 = vmatpush1.bf16.msra.mxu0 0
        %346 = vmatprep.subr.bf16.mxu0 0
        %347 = vmatpush1.bf16.msra.mxu0 0
        %348 = vmatprep.subr.bf16.mxu0 0
        %349 = vmatpush1.bf16.msra.mxu0 0
        %350 = vmatprep.subr.bf16.mxu0 0
        %351 = vmatpush1.bf16.msra.mxu0 0
        %352 = vmatprep.subr.bf16.mxu0 0
        %353 = vmatpush1.bf16.msra.mxu0 0
        %354 = vmatprep.subr.bf16.mxu0 0
        %355 = vmatpush1.bf16.msra.mxu0 0
        %356 = vmatprep.subr.bf16.mxu0 0
        %357 = vmatpush1.bf16.msra.mxu0 0
        %358 = vmatprep.subr.bf16.mxu0 0
        %359 = vmatpush1.bf16.msra.mxu0 0
        %360 = vmatprep.subr.bf16.mxu0 0
        %361 = vmatpush1.bf16.msra.mxu0 0
        %362 = vmatprep.subr.bf16.mxu0 0
        %363 = vmatpush1.bf16.msra.mxu0 0
        %364 = vmatprep.subr.bf16.mxu0 0
        %365 = vmatpush1.bf16.msra.mxu0 0
        %366 = vmatprep.subr.bf16.mxu0 0
        %367 = vmatpush1.bf16.msra.mxu0 0
        %368 = vmatprep.subr.bf16.mxu0 0
        %369 = vmatpush1.bf16.msra.mxu0 0
        %370 = vmatprep.mubr.bf16.mxu0 0
        %371 = vmatmul.mubr.bf16.gmra.mrb[0].mxu0 %v330
        %v372 = vpop.f32.mrb[0].mxu0
        %v373 = vadd.f32 0.0, %v372
        %v374 = vpop.f32.mrb[0].mxu0
        %v375 = vadd.f32 0.0, %v374
        %v376 = vpop.f32.mrb[0].mxu0
        %v377 = vpop.f32.mrb[0].mxu0
        %378 = vdwg.mxu0
        %v379 = vunpack.c.l.bf16 %v255
        %v382 = vcombine.low %v373, %v375
        %v384 = vadd.f32 %v379, %v382
        %v385 = vld [vmem:[%s4] sm:$0xf]
        %387 = vset.pattern.permute.xlu0 0
        %388 = vperm.xlu0 %387, %v385
        %v389 = vpop.permute.xlu0 %388
        %v391 = vunpack.c.l.s4 839922192
        %v392 = vunpack.c.0.s8 %v391
        %v393 = vlaneseq
        %v394 = vshrl.u32 %v393, 7
        %v395 = vsub.s32 %v392, %v394
        %v396 = vrot.slane %v389, %v395
        %v398 = vadd.f32 %v384, %v396
        %v399 = vmax.f32 %v398, 0.0
        %400 = vst [vmem:[%s242] sm:$0xff] %v399
        %s401 = sand.u32 %s153, 1
        %s402 = scalar_lea.sflag [#allocation3], %s401
        %s403 = sand.u32 %s153, 1
        %s404 = smul.addr %s403, 8
        %s405 = scalar_lea.vmem [#allocation2], %s404
        // Predicated region
        $region41: #{tpu_custom_call.1} parent=39 // pred_check
          %p406 = pneg %p163
        $region42: #{tpu_custom_call.1} parent=39 // pred_check_branch
          %408 = sbr.rel (%p406) target = $region44
        $region43: #{tpu_custom_call.1} parent=39 // pred_region
          %s409 = smul.u32 2, %s24
          %s411 = ssub.s32 128, 128
          %412 = vsyncadd %s402, %s411
          %s413 = smul.addr %s23, 2
          %s414 = sadd.s32 %s409, %s413
          %s415 = smul.addr %s414, 64
          %s416 = scalar_lea.hbm %s5, %s415
          %s418 = sshll.u32 %s405, 4
          %s419 = int_to_ptr.vmem [resolvable:$true] %s418
          %421 = dma.vmem_to_hbm [thread:$0]  %s419, 128, %s416, %s402
        $region44: #{tpu_custom_call.1} parent=39 // pred_fallthru
          _
      $region40: #{tpu_custom_call.1} parent=5 // pred_fallthru
        _
      %p422 = scmp.le.s32.totalorder 2, %s14
      // Predicated region
      $region45: #{tpu_custom_call.1} parent=5 // pred_check
        %p423 = pneg %p422
      $region46: #{tpu_custom_call.1} parent=5 // pred_check_branch
        %425 = sbr.rel (%p423) target = $region48
      $region47: #{tpu_custom_call.1} parent=5 // pred_region
        %s426 = ssub.s32 %s14, 2
        // Predicated region
        $region49: #{tpu_custom_call.1} parent=47 // pred_check
          %p427 = pneg %p169
        $region50: #{tpu_custom_call.1} parent=47 // pred_check_branch
          %429 = sbr.rel (%p427) target = $region52
        $region51: #{tpu_custom_call.1} parent=47 // pred_region
          %s430 = sand.u32 %s154, 1
          %s431 = scalar_lea.sflag [#allocation3], %s430
          %s432 = sand.u32 %s154, 1
          %s433 = smul.addr %s432, 8
          %s434 = scalar_lea.vmem [#allocation2], %s433
          %435 = dma.done %s431, 128
        $region52: #{tpu_custom_call.1} parent=47 // pred_fallthru
          _
      $region48: #{tpu_custom_call.1} parent=5 // pred_fallthru
        _
    $region6: #{tpu_custom_call.1} parent=1 // loop_footer
      %s18 = sadd.s32 1, %s14
    $region7: #{tpu_custom_call.1} parent=1 // loop_footer_branch
      %13 = sbr.rel target = $region3
    $region8: #{tpu_custom_call.1} parent=1 // loop_exit
      _
    %436 = vsyncpa [#allocation3], 1
    %s437 = scalar_lea.sflag [#allocation3], 1
    %438 = vsyncpa %s437, 1

</llo_original>
